<compile_context>
chip_gen: v5e
topology: v5e:2x2
jax: 0.10.0
libtpu: 0.0.40
codegen_flags: <defaults>
</compile_context>

<pallas_src>
import math
import functools

import jax
import jax.numpy as jnp
from jax.experimental import pallas as pl
from jax.experimental.pallas import tpu as pltpu

LANE = 128


def _pad_dim(d, m=LANE):
    return ((d + m - 1) // m) * m


def _row_tile(n, cap=256):
    tm = n if n <= cap else cap
    assert n % 8 == 0 and n % tm == 0, "n must be a multiple of 8 (and of the tile when large)"
    return tm


def _col_tile(n, cap=512):
    tk = n if n <= cap else cap
    assert n % tk == 0, "n must be a multiple of the K tile when large"
    return tk


def _vmem_limit():
    # v5e/v6e have 128 MiB physical VMEM -> allow large tiles; v7x only has 64 MiB.
    try:
        cap = pltpu.get_tpu_info().vmem_capacity_bytes
        return int(min(cap * 3 // 4, 100 * 1024 * 1024))
    except Exception:
        return 48 * 1024 * 1024


_VMEM_LIMIT = _vmem_limit()


# ----------------------------------------------------------------------------
# Kernel A:  u = (relu?)(x) @ W     (row-block grid, bf16 MXU operands, bf16 output)
# ----------------------------------------------------------------------------
def _xw_kernel(x_ref, w_ref, u_ref, *, relu_input):
    x = x_ref[...]
    if relu_input:
        x = jnp.maximum(x, 0.0)
    u = jnp.dot(x.astype(jnp.bfloat16), w_ref[...],
                preferred_element_type=jnp.float32)
    u_ref[...] = u.astype(jnp.bfloat16)


def feature_transform(x_pad, w_bf16, *, relu_input=False):
    n, fin_p = x_pad.shape
    fout_p = w_bf16.shape[1]
    tm = _row_tile(n)
    kernel = functools.partial(_xw_kernel, relu_input=relu_input)
    return pl.pallas_call(
        kernel,
        out_shape=jax.ShapeDtypeStruct((n, fout_p), jnp.bfloat16),
        grid_spec=pltpu.PrefetchScalarGridSpec(
            num_scalar_prefetch=0,
            grid=(n // tm,),
            in_specs=[pl.BlockSpec((tm, fin_p), lambda i: (i, 0)),     # x row block
                      pl.BlockSpec((fin_p, fout_p), lambda i: (0, 0))],  # W (resident)
            out_specs=pl.BlockSpec((tm, fout_p), lambda i: (i, 0)),
        ),
        compiler_params=pltpu.CompilerParams(
            dimension_semantics=("parallel",),
            vmem_limit_bytes=_VMEM_LIMIT),
    )(x_pad, w_bf16)


# ----------------------------------------------------------------------------
# Kernel B:  out = adj @ u + b      (K-tiled, f32 VMEM accumulator)
#            mixed variant fuses:   x = m0*(mr*cur + (1-mr)*last) + (1-m0)*one
# ----------------------------------------------------------------------------
def _adj_plain_kernel(adj_ref, u_ref, b_ref, out_ref, acc_ref):
    k = pl.program_id(1)

    @pl.when(k == 0)
    def _():
        acc_ref[...] = jnp.zeros_like(acc_ref)

    acc_ref[...] += jnp.dot(adj_ref[...], u_ref[...],
                            preferred_element_type=jnp.float32)

    @pl.when(k == pl.num_programs(1) - 1)
    def _():
        out_ref[...] = acc_ref[...] + b_ref[...]


def _adj_mix_kernel(adj_ref, u_ref, b_ref, mr_ref, m0_ref, last_ref, one_ref,
                    out_ref, acc_ref):
    k = pl.program_id(1)

    @pl.when(k == 0)
    def _():
        acc_ref[...] = jnp.zeros_like(acc_ref)

    acc_ref[...] += jnp.dot(adj_ref[...], u_ref[...],
                            preferred_element_type=jnp.float32)

    @pl.when(k == pl.num_programs(1) - 1)
    def _():
        cur = acc_ref[...] + b_ref[...]
        mr = mr_ref[...]
        m0 = m0_ref[...]
        mixed = mr * cur + (1.0 - mr) * last_ref[...]
        out_ref[...] = m0 * mixed + (1.0 - m0) * one_ref[...]


def gcn_aggregate(adj_bf16, u_bf16, b_pad, *, m_rand=None, mask0=None,
                  last=None, one=None):
    n = adj_bf16.shape[0]
    fout_p = u_bf16.shape[1]
    tm = _row_tile(n)
    tk = _col_tile(n)
    adj_spec = pl.BlockSpec((tm, tk), lambda i, k: (i, k))
    u_spec = pl.BlockSpec((tk, fout_p), lambda i, k: (k, 0))
    vec_spec = pl.BlockSpec((1, fout_p), lambda i, k: (0, 0))
    row_spec = pl.BlockSpec((tm, fout_p), lambda i, k: (i, 0))

    if m_rand is None:
        kernel = _adj_plain_kernel
        in_specs = [adj_spec, u_spec, vec_spec]
        operands = (adj_bf16, u_bf16, b_pad)
    else:
        kernel = _adj_mix_kernel
        in_specs = [adj_spec, u_spec, vec_spec, vec_spec, vec_spec, row_spec, row_spec]
        operands = (adj_bf16, u_bf16, b_pad, m_rand, mask0, last, one)

    return pl.pallas_call(
        kernel,
        out_shape=jax.ShapeDtypeStruct((n, fout_p), jnp.float32),
        grid_spec=pltpu.PrefetchScalarGridSpec(
            num_scalar_prefetch=0,
            grid=(n // tm, n // tk),
            in_specs=in_specs,
            out_specs=row_spec,
            scratch_shapes=[pltpu.VMEM((tm, fout_p), jnp.float32)],
        ),
        compiler_params=pltpu.CompilerParams(
            dimension_semantics=("parallel", "arbitrary"),
            vmem_limit_bytes=_VMEM_LIMIT),
    )(*operands)


# ----------------------------------------------------------------------------
# bind_loss: per-query-block partial sums (dropout + normalize done once in the wrapper)
# ----------------------------------------------------------------------------
def _bind_loss_kernel(q1_ref, q2_ref, k1_ref, k2_ref, out_ref, *, inv_tau, inv_n):
    # q*/k* already L2-normalized and scaled by sqrt(1/tau) -> dot products == sim/tau.
    q1 = q1_ref[...]
    q2 = q2_ref[...]
    dims = (((1,), (1,)), ((), ()))     # contract last dims: q @ k.T with no transpose
    s11 = jax.lax.dot_general(q1, k1_ref[...], dims,
                              preferred_element_type=jnp.float32)   # (tm, n)
    s22 = jax.lax.dot_general(q2, k2_ref[...], dims,
                              preferred_element_type=jnp.float32)
    # exp with the known maximum (1/tau) subtracted: overflow-proof for any tau.
    row1 = jnp.sum(jnp.exp(s11 - inv_tau), axis=1, keepdims=True)
    row2 = jnp.sum(jnp.exp(s22 - inv_tau), axis=1, keepdims=True)
    # Self-similarity diagonal from the *same* bf16 operands as the matmul, so the
    # diagonal term of row1/row2 cancels consistently (up to accumulation order).
    q1f = q1.astype(jnp.float32)
    q2f = q2.astype(jnp.float32)
    d11 = jnp.sum(q1f * q1f, axis=-1, keepdims=True)
    d22 = jnp.sum(q2f * q2f, axis=-1, keepdims=True)
    s12 = jnp.sum(q1f * q2f, axis=-1, keepdims=True)   # only the diag of sim(z1,z2) is used
    neg = row1 - jnp.exp(d11 - inv_tau) + row2 - jnp.exp(d22 - inv_tau)
    ct = (inv_tau + jnp.log(neg)) - s12                 # == -log(exp(s12) / neg)
    block_sum = jnp.sum(ct) * inv_n
    out_ref[...] = jnp.broadcast_to(block_sum, out_ref.shape).astype(jnp.float32)


def bind_loss(x_pad, key, *, tau, dropout_p):
    n, fp = x_pad.shape
    tm = _row_tile(n)
    inv_tau = 1.0 / float(tau)
    p = float(dropout_p)

    def _drop(k, z):
        if p <= 0.0:
            return z
        keep = jax.random.bernoulli(k, 1.0 - p, z.shape)
        return jnp.where(keep, z / (1.0 - p), 0.0)

    def _norm(z):   # F.normalize: z / max(||z||_2, 1e-12)
        nrm = jnp.sqrt(jnp.sum(z * z, axis=-1, keepdims=True))
        return z / jnp.maximum(nrm, 1e-12)

    k1, k2 = jax.random.split(key)
    z1 = _drop(k1, x_pad)
    z2 = _drop(k2, x_pad)
    scale = jnp.float32(math.sqrt(inv_tau))     # fold 1/tau into the operands
    n1 = (_norm(z1) * scale).astype(jnp.bfloat16)
    n2 = (_norm(z2) * scale).astype(jnp.bfloat16)

    grid = n // tm
    kernel = functools.partial(_bind_loss_kernel, inv_tau=float(inv_tau),
                               inv_n=float(1.0 / n))
    q_spec = pl.BlockSpec((tm, fp), lambda i: (i, 0))
    k_spec = pl.BlockSpec((n, fp), lambda i: (0, 0))
    # TODO(synk): for n >= ~16k also tile the key axis (2-D grid with running row sums)
    # so VMEM stays O(tm*tk) instead of O(n*fp).
    partials = pl.pallas_call(
        kernel,
        out_shape=jax.ShapeDtypeStruct((grid, 8, LANE), jnp.float32),
        grid_spec=pltpu.PrefetchScalarGridSpec(
            num_scalar_prefetch=0,
            grid=(grid,),
            in_specs=[q_spec, q_spec, k_spec, k_spec],
            out_specs=pl.BlockSpec((1, 8, LANE), lambda i: (i, 0, 0)),
        ),
        compiler_params=pltpu.CompilerParams(
            dimension_semantics=("parallel",),   # independent per-block partials (v7x 2-TC)
            vmem_limit_bytes=_VMEM_LIMIT),
    )(n1, n2, n1, n2)
    return jnp.sum(partials[:, 0, 0])


# ----------------------------------------------------------------------------
# Glue (parameter init, random masks, forward orchestration)
# ----------------------------------------------------------------------------
def get_mask(key, feat_dim, drop_prob):
    """drop_mask = U(0,1) < p, OR'ed with a randomly placed single True."""
    k1, k2 = jax.random.split(key)
    drop_mask = jax.random.uniform(k1, (feat_dim,)) < drop_prob
    one_idx = jax.random.randint(k2, (), 0, feat_dim)
    adding = jnp.arange(feat_dim) == one_idx
    return jnp.logical_or(drop_mask, adding).astype(jnp.float32)


def _pad_row(vec, width):
    return jnp.pad(vec, (0, width - vec.shape[0])).reshape(1, width).astype(jnp.float32)


def init_params(key, nfeat, hid, nclass, nlayer):
    assert nlayer >= 1
    dims = [nfeat] + [hid] * (nlayer - 1)
    hidden = []
    for i in range(nlayer - 1):
        key, kw = jax.random.split(key)
        w = 0.1 * jax.random.normal(kw, (dims[i], hid), dtype=jnp.float32)
        w_pad = jnp.pad(w, ((0, _pad_dim(dims[i]) - dims[i]),
                            (0, _pad_dim(hid) - hid))).astype(jnp.bfloat16)
        b_pad = jnp.zeros((1, _pad_dim(hid)), dtype=jnp.float32)
        hidden.append((w_pad, b_pad))
    key, kw = jax.random.split(key)
    w_out = 0.1 * jax.random.normal(kw, (dims[-1], nclass), dtype=jnp.float32)
    w_out_pad = jnp.pad(w_out, ((0, _pad_dim(dims[-1]) - dims[-1]),
                                (0, _pad_dim(nclass) - nclass))).astype(jnp.bfloat16)
    b_out_pad = jnp.zeros((1, _pad_dim(nclass)), dtype=jnp.float32)
    return hidden, (w_out_pad, b_out_pad)


def tsc_gcn_forward(params, x, adj, *, hid, nclass, tau, lamda, dropout_c, rng_key):
    hidden, (w_out, b_out) = params
    n, nfeat = x.shape
    x_pad = jnp.pad(x, ((0, 0), (0, _pad_dim(nfeat) - nfeat))).astype(jnp.float32)
    adj_bf16 = adj.astype(jnp.bfloat16)     # bf16 adjacency in HBM, reused by every layer

    loss = jnp.float32(0.0)
    res_rate = math.log(lamda / 1.0 + 1.0)
    key = rng_key
    one = None
    mask0 = None

    for l, (w, b) in enumerate(hidden):
        fout_p = w.shape[1]
        u = feature_transform(x_pad, w)                 # u = x @ W  (bf16, re-associated)
        if l == 0:
            # self.dropout -> eval-mode identity; plain GCN layer (no mask mix).
            x_pad = gcn_aggregate(adj_bf16, u, b)
            one = x_pad
            key, km = jax.random.split(key)
            mask0 = _pad_row(get_mask(km, hid, res_rate), fout_p)
        else:
            # fused: current = adj@u + b; x = m*current + (1-m)*x; x = mask0*x + (1-mask0)*one
            rate = math.log(lamda / (l + 2) + 1.0)
            key, km = jax.random.split(key)
            m_rand = _pad_row(get_mask(km, hid, rate), fout_p)
            x_pad = gcn_aggregate(adj_bf16, u, b, m_rand=m_rand, mask0=mask0,
                                  last=x_pad, one=one)
            if l == len(hidden) - 1:
                key, kd = jax.random.split(key)
                loss = loss + bind_loss(x_pad, kd, tau=tau, dropout_p=dropout_c)

    # x = relu(x); dropout (identity); out_layer(x, adj)  -- relu fused into the x@W kernel.
    u = feature_transform(x_pad, w_out, relu_input=True)
    out_pad = gcn_aggregate(adj_bf16, u, b_out)
    return out_pad[:, :nclass], loss, 0, 0


# ----------------------------------------------------------------------------
if __name__ == "__main__":
    N, NFEAT, HID, NCLASS, NLAYER = 16, 8, 32, 4, 3
    TAU, LAMDA_C, DROPOUT_C = 0.5, 0.5, 0.2

    root = jax.random.PRNGKey(0)
    k_x, k_adj, k_param, k_fwd = jax.random.split(root, 4)

    x = jax.random.normal(k_x, (N, NFEAT), dtype=jnp.float32)
    # symmetric row-normalized random adjacency (with self loops)
    a = (jax.random.uniform(k_adj, (N, N)) < 0.3).astype(jnp.float32)
    a = jnp.maximum(a, a.T) + jnp.eye(N, dtype=jnp.float32)
    deg = jnp.sum(a, axis=1, keepdims=True)
    adj = a / deg

    params = init_params(k_param, NFEAT, HID, NCLASS, NLAYER)

    out, loss, _, _ = tsc_gcn_forward(
        params, x, adj, hid=HID, nclass=NCLASS,
        tau=TAU, lamda=LAMDA_C, dropout_c=DROPOUT_C, rng_key=k_fwd)
    jax.block_until_ready(out)
    jax.block_until_ready(loss)

    assert out.shape == (N, NCLASS)
    assert jnp.isfinite(out).all() and jnp.isfinite(loss)
    print("KERNEL_OK")
</pallas_src>

<mosaic_0001>
module attributes {stable_mosaic.version = 11 : i64} {
  func.func @_xw_kernel(%arg0: i32, %arg1: memref<16x128xf32, #tpu.memory_space<vmem>>, %arg2: memref<128x128xbf16, #tpu.memory_space<vmem>>, %arg3: memref<16x128xbf16, #tpu.memory_space<vmem>>) attributes {dimension_semantics = [#tpu.dimension_semantics<parallel>], iteration_bounds = array<i64: 1>, scalar_prefetch = 0 : i64, scratch_operands = 0 : i64, tpu.core_type = #tpu.core_type<tc>, window_params = [{transform_indices = @transform_0, window_bounds = array<i64: 16, 128>}, {pipeline_mode = #tpu.pipeline_mode<synchronous>, transform_indices = @transform_1, window_bounds = array<i64: 128, 128>}, {transform_indices = @transform_2, window_bounds = array<i64: 16, 128>}]} {
    %c0 = arith.constant 0 : index
    %c0_0 = arith.constant 0 : index
    %0 = vector.load %arg1[%c0, %c0_0] : memref<16x128xf32, #tpu.memory_space<vmem>>, vector<16x128xf32>
    %1 = arith.truncf %0 : vector<16x128xf32> to vector<16x128xbf16>
    %c0_1 = arith.constant 0 : index
    %c0_2 = arith.constant 0 : index
    %2 = vector.load %arg2[%c0_1, %c0_2] : memref<128x128xbf16, #tpu.memory_space<vmem>>, vector<128x128xbf16>
    %cst = arith.constant dense<0.000000e+00> : vector<16x128xf32>
    %3 = tpu.matmul %1, %2, %cst {dimension_numbers = #tpu.dot_dimension_numbers<[1], [0], [0], [1], [0, 0, 1, 1], [], []>} : vector<16x128xbf16>, vector<128x128xbf16>, vector<16x128xf32> -> vector<16x128xf32>
    %4 = arith.truncf %3 : vector<16x128xf32> to vector<16x128xbf16>
    %c0_3 = arith.constant 0 : index
    %c0_4 = arith.constant 0 : index
    %5 = vector.load %arg3[%c0_3, %c0_4] : memref<16x128xbf16, #tpu.memory_space<vmem>>, vector<16x128xbf16>
    tpu.vector_store %arg3[%c0_3, %c0_4], %4 {strides = array<i32>} : memref<16x128xbf16, #tpu.memory_space<vmem>>, vector<16x128xbf16>,
    return
  }
  func.func @transform_0(%arg0: i32) -> (i32, i32) {
    %c0_i32 = arith.constant 0 : i32
    %c0_i32_0 = arith.constant 0 : i32
    return %arg0, %c0_i32 : i32, i32
  }
  func.func @transform_1(%arg0: i32) -> (i32, i32) {
    %c0_i32 = arith.constant 0 : i32
    %c0_i32_0 = arith.constant 0 : i32
    %c0_i32_1 = arith.constant 0 : i32
    return %c0_i32, %c0_i32_0 : i32, i32
  }
  func.func @transform_2(%arg0: i32) -> (i32, i32) {
    %c0_i32 = arith.constant 0 : i32
    %c0_i32_0 = arith.constant 0 : i32
    return %arg0, %c0_i32 : i32, i32
  }
}

</mosaic_0001>

<llo_original>
// kernel: tpu_custom_call.1
$region0: #{tpu_custom_call.1}
  #allocation0 [shape = 'u32[]', space=smem, size = 0x4, offset = 0x4, fixed_abs, tag = 'smem constant byte address 0x4 - core index']
  #allocation1 [shape = 'u32[72,128]{1,0:T(1,128)}', space=vmem, size = 0x9000, scoped, tag = 'internal scratch']
  %s0 = inlined_call_operand.hbm [shape: f32[16,128], index: 0, kind: input, shape index: {}]
  %s1 = inlined_call_operand.hbm [shape: bf16[128,128], index: 1, kind: input, shape index: {}]
  %s2 = inlined_call_operand.hbm [shape: bf16[16,128], index: 2, kind: output, shape index: {}]
  %s3 = sld [smem:[#allocation0]]
  $region26: #{tpu_custom_call.1} parent=0
    _
  %s5 = ssub.s32 1, %s3
  %s6 = scalar_select 0, %s5, %s3
  $region1: #{tpu_custom_call.1} parent=0
    #allocation2 [shape = 'u8[8192]{0}', space=vmem, size = 0x2000, scoped, tag = 'input window, operand 0, single buffered']
    #allocation3 [shape = 's32[1]{0}', space=sflag, size = 0x4, scoped, tag = 'scoped memory for tpu_custom_call.1']
    #allocation4 [shape = 's32[1]{0}', space=sflag, size = 0x4, scoped, tag = 'scoped memory for tpu_custom_call.1']
    #allocation5 [shape = 'u8[32768]{0}', space=vmem, size = 0x8000, scoped, tag = 'input window, operand 1, single buffered']
    #allocation6 [shape = 's32[1]{0}', space=sflag, size = 0x4, scoped, tag = 'scoped memory for tpu_custom_call.1']
    #allocation7 [shape = 'u8[4096]{0}', space=vmem, size = 0x1000, scoped, tag = 'output window, operand 0, single buffered']
    %7 = vsyncpa [#allocation3], 0
    %8 = vsyncpa [#allocation6], 0
    %9 = vsyncpa [#allocation4], 0
    // Predicated region
    $region2: #{tpu_custom_call.1} parent=1 // pred_check
      _
    $region3: #{tpu_custom_call.1} parent=1 // pred_check_branch
      %11 = sbr.rel (0) target = $region5
    $region4: #{tpu_custom_call.1} parent=1 // pred_region
      %13 = vsyncadd [#allocation3], 0
      %s14 = sshll.u32 %s0, 4
      %s15 = int_to_ptr.hbm [resolvable:$true] %s14
      %s16 = sshll.u32 [#allocation2], 4
      %s17 = int_to_ptr.vmem [resolvable:$true] %s16
      %22 = dma.hbm_to_vmem [thread:$0]  %s15, 256, %s17, [#allocation3], 128, 128, 8
    $region5: #{tpu_custom_call.1} parent=1 // pred_fallthru
      _
    // Predicated region
    $region6: #{tpu_custom_call.1} parent=1 // pred_check
      _
    $region7: #{tpu_custom_call.1} parent=1 // pred_check_branch
      %24 = sbr.rel (0) target = $region9
    $region8: #{tpu_custom_call.1} parent=1 // pred_region
      %26 = vsyncadd [#allocation6], 0
      %s27 = sshll.u32 %s1, 4
      %s28 = int_to_ptr.hbm [resolvable:$true] %s27
      %s29 = sshll.u32 [#allocation5], 4
      %s30 = int_to_ptr.vmem [resolvable:$true] %s29
      %35 = dma.hbm_to_vmem [thread:$0]  %s28, 1024, %s30, [#allocation6], 64, 64, 4
    $region9: #{tpu_custom_call.1} parent=1 // pred_fallthru
      _
    // Predicated region
    $region10: #{tpu_custom_call.1} parent=1 // pred_check
      _
    $region11: #{tpu_custom_call.1} parent=1 // pred_check_branch
      %37 = sbr.rel (0) target = $region13
    $region12: #{tpu_custom_call.1} parent=1 // pred_region
      %39 = dma.done [#allocation3], 256
    $region13: #{tpu_custom_call.1} parent=1 // pred_fallthru
      _
    // Predicated region
    $region14: #{tpu_custom_call.1} parent=1 // pred_check
      _
    $region15: #{tpu_custom_call.1} parent=1 // pred_check_branch
      %41 = sbr.rel (0) target = $region17
    $region16: #{tpu_custom_call.1} parent=1 // pred_region
      %43 = dma.done [#allocation6], 1024
    $region17: #{tpu_custom_call.1} parent=1 // pred_fallthru
      _
    %v44 = vld [vmem:[#allocation2] sm:$0xff]
    %v45 = vld [vmem:[#allocation2 + $0x8] sm:$0xff]
    %v46 = vpack.c.bf16 %v45, %v44
    %v47 = vld [vmem:[#allocation5] sm:$0xf]
    %v48 = vld [vmem:[#allocation5 + $0x4] sm:$0xf]
    %v49 = vld [vmem:[#allocation5 + $0x8] sm:$0xf]
    %v50 = vld [vmem:[#allocation5 + $0xc] sm:$0xf]
    %v51 = vld [vmem:[#allocation5 + $0x10] sm:$0xf]
    %v52 = vld [vmem:[#allocation5 + $0x14] sm:$0xf]
    %v53 = vld [vmem:[#allocation5 + $0x18] sm:$0xf]
    %v54 = vld [vmem:[#allocation5 + $0x1c] sm:$0xf]
    %v55 = vld [vmem:[#allocation5 + $0x20] sm:$0xf]
    %v56 = vld [vmem:[#allocation5 + $0x24] sm:$0xf]
    %v57 = vld [vmem:[#allocation5 + $0x28] sm:$0xf]
    %v58 = vld [vmem:[#allocation5 + $0x2c] sm:$0xf]
    %v59 = vld [vmem:[#allocation5 + $0x30] sm:$0xf]
    %v60 = vld [vmem:[#allocation5 + $0x34] sm:$0xf]
    %v61 = vld [vmem:[#allocation5 + $0x38] sm:$0xf]
    %v62 = vld [vmem:[#allocation5 + $0x3c] sm:$0xf]
    %v79 = vunpack.c.l.b16 %v47
    %v80 = vunpack.c.l.b16 %v48
    %v81 = vunpack.c.l.b16 %v49
    %v82 = vunpack.c.l.b16 %v50
    %v83 = vunpack.c.l.b16 %v51
    %v84 = vunpack.c.l.b16 %v52
    %v85 = vunpack.c.l.b16 %v53
    %v86 = vunpack.c.l.b16 %v54
    %v87 = vunpack.c.l.b16 %v55
    %v88 = vunpack.c.l.b16 %v56
    %v89 = vunpack.c.l.b16 %v57
    %v90 = vunpack.c.l.b16 %v58
    %v91 = vunpack.c.l.b16 %v59
    %v92 = vunpack.c.l.b16 %v60
    %v93 = vunpack.c.l.b16 %v61
    %v94 = vunpack.c.l.b16 %v62
    %v95 = vpack.c.b16 %v80, %v79
    %v96 = vpack.c.b16 %v82, %v81
    %v97 = vpack.c.b16 %v84, %v83
    %v98 = vpack.c.b16 %v86, %v85
    %v99 = vpack.c.b16 %v88, %v87
    %v100 = vpack.c.b16 %v90, %v89
    %v101 = vpack.c.b16 %v92, %v91
    %v102 = vpack.c.b16 %v94, %v93
    %111 = vmatpush.bf16.msra.mxu0 %v102
    %112 = vmatpush.bf16.msra.mxu0 %v101
    %113 = vmatpush.bf16.msra.mxu0 %v100
    %114 = vmatpush.bf16.msra.mxu0 %v99
    %115 = vmatpush.bf16.msra.mxu0 %v98
    %116 = vmatpush.bf16.msra.mxu0 %v97
    %117 = vmatpush.bf16.msra.mxu0 %v96
    %118 = vmatpush.bf16.msra.mxu0 %v95
    %119 = vmatmul.bf16.gmra.mxu0 %v46
    %v120 = vpop.f32.mrf.mxu0
    %v121 = vadd.f32 0.0, %v120
    %v122 = vpop.f32.mrf.mxu0
    %v123 = vadd.f32 0.0, %v122
    %124 = vdwg.mxu0
    %v125 = vpack.c.bf16 %v121, %v121
    %v126 = vpack.c.bf16 %v123, %v123
    %127 = vst [vmem:[#allocation7] sm:$0xf] %v125
    %128 = vst [vmem:[#allocation7 + $0x4] sm:$0xf] %v126
    // Predicated region
    $region18: #{tpu_custom_call.1} parent=1 // pred_check
      _
    $region19: #{tpu_custom_call.1} parent=1 // pred_check_branch
      %130 = sbr.rel (0) target = $region21
    $region20: #{tpu_custom_call.1} parent=1 // pred_region
      %132 = vsyncadd [#allocation4], 0
      %s133 = sshll.u32 [#allocation7], 4
      %s134 = int_to_ptr.vmem [resolvable:$true] %s133
      %s135 = sshll.u32 %s2, 4
      %s136 = int_to_ptr.hbm [resolvable:$true] %s135
      %141 = dma.vmem_to_hbm [thread:$0]  %s134, 128, %s136, [#allocation4], 64, 64, 4
    $region21: #{tpu_custom_call.1} parent=1 // pred_fallthru
      _
    // Predicated region
    $region22: #{tpu_custom_call.1} parent=1 // pred_check
      _
    $region23: #{tpu_custom_call.1} parent=1 // pred_check_branch
      %143 = sbr.rel (0) target = $region25
    $region24: #{tpu_custom_call.1} parent=1 // pred_region
      %145 = dma.done [#allocation4], 128
    $region25: #{tpu_custom_call.1} parent=1 // pred_fallthru
      _
    %146 = vsyncpa [#allocation3], 1
    %147 = vsyncpa [#allocation6], 1
    %148 = vsyncpa [#allocation4], 1

</llo_original>
